<compile_context>
chip_gen: v7x
topology: tpu7x:2x2x1
jax: 0.10.0
libtpu: 0.0.40
codegen_flags: <defaults>
</compile_context>

<pallas_src>
import jax
import jax.numpy as jnp
from jax.experimental import pallas as pl
from jax.experimental.pallas import tpu as pltpu


def _normalize_kernel(scale_ref, bias_ref, x_ref, o_ref):
    # scale_ref / bias_ref: (tr, 1) per-row scalars, broadcast along the lane axis.
    # x_ref / o_ref: (tr, tc) tiles of the flattened (rows, cols) array.
    # Single VPU FMA; compute dtype decided in the wrapper (f32, or bf16 for
    # bf16 inputs so the upcast doesn't double vreg/VMEM footprint).
    o_ref[...] = (x_ref[...] * scale_ref[...] + bias_ref[...]).astype(o_ref.dtype)


def _round_up(x, m):
    return (x + m - 1) // m * m


def _largest_divisor_multiple(total, align, cap):
    """Largest multiple of `align` that divides `total` and is <= cap (0 if none)."""
    best = 0
    t = align
    cap = min(total, cap)
    while t <= cap:
        if total % t == 0:
            best = t
        t += align
    return best


def normalize_by_channel_mean_std(x, mean, std):
    """(x - mean[None,:,None,None]) / std[None,:,None,None] for NCHW x.

    Pure streaming (HBM-bandwidth bound) kernel.  NOTE: if the consumer can
    fuse the per-channel scale+bias (e.g. fold it into the first conv's
    weights), prefer that over running this standalone -- the full-tensor
    read+write round trip is the irreducible cost here.
    """
    N, C, H, W = x.shape
    R, L = N * C, H * W
    itemsize = jnp.dtype(x.dtype).itemsize

    # bf16 inputs: keep the FMA in bf16 (v6e/v7x have a bf16 VALU; the kernel
    # is HBM-bound either way and this halves per-tile vreg/VMEM pressure).
    compute_dtype = jnp.bfloat16 if x.dtype == jnp.bfloat16 else jnp.float32

    # Per-channel reciprocal + bias, computed once in f32 in the wrapper.
    # (x*inv_std + (-mean*inv_std)) rounds slightly differently from a true
    # divide; the relative error is larger for bf16 inputs.
    inv_std = 1.0 / std.astype(jnp.float32)
    bias = -mean.astype(jnp.float32) * inv_std
    scale_rows = jnp.broadcast_to(inv_std[None, :], (N, C)).reshape(R, 1).astype(compute_dtype)
    bias_rows = jnp.broadcast_to(bias[None, :], (N, C)).reshape(R, 1).astype(compute_dtype)

    x2d = x.reshape(R, L)  # free relayout for contiguous NCHW

    # ---- Tile policy -------------------------------------------------------
    # ~6 MiB tiles: tiled-copy efficiency is ~86%+ of HBM roofline at >=4 MiB
    # and amortizes the ~0.35us per-grid-step overhead; in+out double-buffered
    # (4x tile bytes) stays well under every generation's VMEM.
    MAX_TILE_BYTES = 6 * 1024 * 1024
    # Sublane packing of the dtype: 8 rows (f32), 16 (bf16), 32 (int8/fp8).
    sub_align = max(8, 32 // itemsize)

    # Lane axis: pad L to a multiple of 128 so every store is a full unmasked
    # lane-dense vst and DMA segments are >= 512 B.  (One-off extra copy; only
    # taken for awkward H*W -- typical spatial sizes are already multiples.)
    Lp = _round_up(L, 128)

    # Row axis: pad only if R can't be tiled legally AND a full-R block would
    # blow the tile budget (rare corner case).
    Rp = R
    if R % 8 != 0 and R * 128 * itemsize > MAX_TILE_BYTES:
        Rp = _round_up(R, 8)

    pad_r, pad_c = Rp - R, Lp - L
    if pad_r or pad_c:
        x2d = jnp.pad(x2d, ((0, pad_r), (0, pad_c)))
    if pad_r:
        scale_rows = jnp.pad(scale_rows, ((0, pad_r), (0, 0)), constant_values=1.0)
        bias_rows = jnp.pad(bias_rows, ((0, pad_r), (0, 0)))

    # Smallest legal row-tile height (prefer packed-sublane alignment).
    if Rp % sub_align == 0:
        row_align = sub_align
    elif Rp % 8 == 0:
        row_align = 8
    else:
        row_align = Rp  # full extent is always a legal block dim

    # Column tile: prefer the full row (one contiguous HBM range per DMA).
    if Lp * itemsize * row_align <= MAX_TILE_BYTES:
        tc = Lp
    else:
        cap_c = max(128, MAX_TILE_BYTES // (row_align * itemsize))
        tc = _largest_divisor_multiple(Lp, 128, cap_c) or 128

    # Row tile: absorb the remaining byte budget.
    max_rows = max(row_align, MAX_TILE_BYTES // (tc * itemsize))
    if row_align == Rp:
        tr = Rp
    else:
        tr = _largest_divisor_multiple(Rp, row_align, max_rows) or Rp

    grid = (Rp // tr, Lp // tc)

    # VMEM budget: in+out tiles double-buffered + lane-padded (tr,1) scale/bias
    # columns double-buffered + headroom.  Floor at 16 MiB (never below any
    # generation's default), cap at 48 MiB (never claim v7x's whole 64 MiB).
    tile_bytes = tr * tc * itemsize
    scalar_bytes = 2 * 2 * tr * 128 * jnp.dtype(compute_dtype).itemsize
    vmem_needed = 2 * 2 * tile_bytes + scalar_bytes + 4 * 1024 * 1024
    vmem_limit = int(min(48 * 1024 * 1024, max(16 * 1024 * 1024, vmem_needed)))

    out2d = pl.pallas_call(
        _normalize_kernel,
        out_shape=jax.ShapeDtypeStruct((Rp, Lp), x.dtype),
        grid_spec=pltpu.PrefetchScalarGridSpec(
            num_scalar_prefetch=0,
            grid=grid,
            in_specs=[
                pl.BlockSpec((tr, 1), lambda i, j: (i, 0)),    # inv_std per row
                pl.BlockSpec((tr, 1), lambda i, j: (i, 0)),    # bias per row
                pl.BlockSpec((tr, tc), lambda i, j: (i, j)),   # x tile
            ],
            out_specs=pl.BlockSpec((tr, tc), lambda i, j: (i, j)),
        ),
        compiler_params=pltpu.CompilerParams(
            # Both axes independent -> megacore / v7x 2-TC sharding; with
            # ~6 MiB tiles any large tensor gives >= 2 steps on a parallel axis.
            dimension_semantics=("parallel", "parallel"),
            vmem_limit_bytes=vmem_limit,
        ),
    )(scale_rows, bias_rows, x2d)

    if pad_r or pad_c:
        out2d = out2d[:R, :L]
    return out2d.reshape(N, C, H, W)


if __name__ == "__main__":
    key = jax.random.PRNGKey(0)
    N, C, H, W = 2, 4, 16, 16

    x = jax.random.normal(key, (N, C, H, W), dtype=jnp.float32)
    # Deterministic per-channel mean/std (synthetic, like the registered buffers).
    mean = jnp.array([0.1, 0.2, 0.3, 0.4], dtype=jnp.float32)
    std = jnp.array([0.5, 0.6, 0.7, 0.8], dtype=jnp.float32)

    out = jax.block_until_ready(normalize_by_channel_mean_std(x, mean, std))

    # Reference check (plain JAX, mirrors torch normalize_fn semantics).
    ref = (x - mean[None, :, None, None]) / std[None, :, None, None]
    assert out.shape == (N, C, H, W)
    # Slightly looser tolerance: kernel uses precomputed reciprocal multiply.
    assert jnp.allclose(out, ref, atol=1e-5, rtol=1e-5)

    print("KERNEL_OK")
</pallas_src>

<mosaic_0001>
module attributes {stable_mosaic.version = 11 : i64} {
  func.func @_normalize_kernel(%arg0: i32, %arg1: i32, %arg2: memref<8x1xf32, #tpu.memory_space<vmem>>, %arg3: memref<8x1xf32, #tpu.memory_space<vmem>>, %arg4: memref<8x256xf32, #tpu.memory_space<vmem>>, %arg5: memref<8x256xf32, #tpu.memory_space<vmem>>) attributes {dimension_semantics = [#tpu.dimension_semantics<parallel>, #tpu.dimension_semantics<parallel>], iteration_bounds = array<i64: 1, 1>, scalar_prefetch = 0 : i64, scratch_operands = 0 : i64, tpu.core_type = #tpu.core_type<tc>, window_params = [{transform_indices = @transform_0, window_bounds = array<i64: 8, 1>}, {transform_indices = @transform_1, window_bounds = array<i64: 8, 1>}, {transform_indices = @transform_2, window_bounds = array<i64: 8, 256>}, {transform_indices = @transform_3, window_bounds = array<i64: 8, 256>}]} {
    %c0 = arith.constant 0 : index
    %c0_0 = arith.constant 0 : index
    %0 = vector.load %arg4[%c0, %c0_0] : memref<8x256xf32, #tpu.memory_space<vmem>>, vector<8x256xf32>
    %c0_1 = arith.constant 0 : index
    %c0_2 = arith.constant 0 : index
    %1 = vector.load %arg2[%c0_1, %c0_2] : memref<8x1xf32, #tpu.memory_space<vmem>>, vector<8x1xf32>
    %2 = vector.broadcast %1 : vector<8x1xf32> to vector<8x256xf32>
    %3 = arith.mulf %0, %2 : vector<8x256xf32>
    %c0_3 = arith.constant 0 : index
    %c0_4 = arith.constant 0 : index
    %4 = vector.load %arg3[%c0_3, %c0_4] : memref<8x1xf32, #tpu.memory_space<vmem>>, vector<8x1xf32>
    %5 = vector.broadcast %4 : vector<8x1xf32> to vector<8x256xf32>
    %6 = arith.addf %3, %5 : vector<8x256xf32>
    %c0_5 = arith.constant 0 : index
    %c0_6 = arith.constant 0 : index
    %7 = vector.load %arg5[%c0_5, %c0_6] : memref<8x256xf32, #tpu.memory_space<vmem>>, vector<8x256xf32>
    tpu.vector_store %arg5[%c0_5, %c0_6], %6 {strides = array<i32>} : memref<8x256xf32, #tpu.memory_space<vmem>>, vector<8x256xf32>,
    return
  }
  func.func @transform_0(%arg0: i32, %arg1: i32) -> (i32, i32) {
    %c0_i32 = arith.constant 0 : i32
    %c0_i32_0 = arith.constant 0 : i32
    return %arg0, %c0_i32 : i32, i32
  }
  func.func @transform_1(%arg0: i32, %arg1: i32) -> (i32, i32) {
    %c0_i32 = arith.constant 0 : i32
    %c0_i32_0 = arith.constant 0 : i32
    return %arg0, %c0_i32 : i32, i32
  }
  func.func @transform_2(%arg0: i32, %arg1: i32) -> (i32, i32) {
    %c0_i32 = arith.constant 0 : i32
    return %arg0, %arg1 : i32, i32
  }
  func.func @transform_3(%arg0: i32, %arg1: i32) -> (i32, i32) {
    %c0_i32 = arith.constant 0 : i32
    return %arg0, %arg1 : i32, i32
  }
}

</mosaic_0001>

<llo_original>
// kernel: tpu_custom_call.1
$region0: #{tpu_custom_call.1}
  #allocation0 [shape = 'u32[]', space=smem, size = 0x4, offset = 0x4, fixed_abs, tag = 'smem constant byte address 0x4 - core index']
  #allocation1 [shape = 'u32[144,128]{1,0:T(1,128)}', space=vmem, size = 0x12000, scoped, tag = 'internal scratch']
  %s0 = inlined_call_operand.vmem [shape: f32[8,1], index: 0, kind: input, shape index: {}]
  %s1 = inlined_call_operand.vmem [shape: f32[8,1], index: 1, kind: input, shape index: {}]
  %s2 = inlined_call_operand.vmem [shape: f32[8,256], index: 2, kind: input, shape index: {}]
  %s3 = inlined_call_operand.hbm [shape: f32[8,256], index: 3, kind: output, shape index: {}]
  %s4 = sld [smem:[#allocation0]]
  $region22: #{tpu_custom_call.1} parent=0
    _
  %s6 = ssub.s32 1, %s4
  %s7 = scalar_select 0, %s6, %s4
  $region1: #{tpu_custom_call.1} parent=0
    #allocation2 [shape = 'u8[8192]{0}', space=vmem, size = 0x2000, scoped, tag = 'output window, operand 0, single buffered']
    #allocation3 [shape = 's32[1]{0}', space=sflag, size = 0x4, scoped, tag = 'scoped memory for tpu_custom_call.1']
    %8 = vsyncpa [#allocation3], 0
    // Predicated region
    $region2: #{tpu_custom_call.1} parent=1 // pred_check
      _
    $region3: #{tpu_custom_call.1} parent=1 // pred_check_branch
      %10 = sbr.rel (0) target = $region5
    $region4: #{tpu_custom_call.1} parent=1 // pred_region
      _
    $region5: #{tpu_custom_call.1} parent=1 // pred_fallthru
      _
    // Predicated region
    $region6: #{tpu_custom_call.1} parent=1 // pred_check
      _
    $region7: #{tpu_custom_call.1} parent=1 // pred_check_branch
      %12 = sbr.rel (0) target = $region9
    $region8: #{tpu_custom_call.1} parent=1 // pred_region
      _
    $region9: #{tpu_custom_call.1} parent=1 // pred_fallthru
      _
    // Predicated region
    $region10: #{tpu_custom_call.1} parent=1 // pred_check
      _
    $region11: #{tpu_custom_call.1} parent=1 // pred_check_branch
      %14 = sbr.rel (0) target = $region13
    $region12: #{tpu_custom_call.1} parent=1 // pred_region
      _
    $region13: #{tpu_custom_call.1} parent=1 // pred_fallthru
      _
    %v15 = vld [vmem:[%s2] sm:$0xff]
    %v16 = vld [vmem:[%s2 + $0x8] sm:$0xff]
    %v17 = vld [vmem:[%s0] sm:$0xff]
    %19 = vset.pattern.permute.xlu0 0
    %20 = vperm.xlu0 %19, %v17
    %v21 = vpop.permute.xlu0 %20
    %v23 = vmul.f32 %v15, %v21
    %v24 = vmul.f32 %v16, %v21
    %v25 = vld [vmem:[%s1] sm:$0xff]
    %27 = vset.pattern.permute.xlu0 0
    %28 = vperm.xlu0 %27, %v25
    %v29 = vpop.permute.xlu0 %28
    %v31 = vadd.f32 %v23, %v29
    %v32 = vadd.f32 %v24, %v29
    %33 = vst [vmem:[#allocation2] sm:$0xff] %v31
    %34 = vst [vmem:[#allocation2 + $0x8] sm:$0xff] %v32
    // Predicated region
    $region14: #{tpu_custom_call.1} parent=1 // pred_check
      _
    $region15: #{tpu_custom_call.1} parent=1 // pred_check_branch
      %36 = sbr.rel (0) target = $region17
    $region16: #{tpu_custom_call.1} parent=1 // pred_region
      %s38 = ssub.s32 256, 256
      %39 = vsyncadd [#allocation3], %s38
      %s41 = sshll.u32 [#allocation2], 4
      %s42 = int_to_ptr.vmem [resolvable:$true] %s41
      %44 = dma.vmem_to_hbm [thread:$0]  %s42, 256, %s3, [#allocation3]
    $region17: #{tpu_custom_call.1} parent=1 // pred_fallthru
      _
    // Predicated region
    $region18: #{tpu_custom_call.1} parent=1 // pred_check
      _
    $region19: #{tpu_custom_call.1} parent=1 // pred_check_branch
      %46 = sbr.rel (0) target = $region21
    $region20: #{tpu_custom_call.1} parent=1 // pred_region
      %47 = dma.done [#allocation3], 256
    $region21: #{tpu_custom_call.1} parent=1 // pred_fallthru
      _
    %48 = vsyncpa [#allocation3], 1

</llo_original>
